<compile_context>
chip_gen: v7x
topology: tpu7x:2x2x1
jax: 0.10.0
libtpu: 0.0.40
codegen_flags: <defaults>
</compile_context>

<pallas_src>
import functools

import jax
import jax.numpy as jnp
from jax.experimental import pallas as pl
from jax.experimental.pallas import tpu as pltpu


def _round_up(x, m):
    return (x + m - 1) // m * m


def _actor_kernel(state_ref, act_ref,
                  w1s_ref, w1a_ref, b1_ref, w2_ref, b2_ref, w3_ref, b3_ref,
                  out_ref, *, max_action, threshold):
    # Activations are streamed in f32; cast to bf16 only at the MXU inputs.
    act_f32 = act_ref[...]
    state_bf = state_ref[...].astype(jnp.bfloat16)
    act_bf = act_f32.astype(jnp.bfloat16)

    # Layer 1: fused concat -> split matmul, f32 accumulation on the MXU.
    h1 = jnp.dot(state_bf, w1s_ref[...], preferred_element_type=jnp.float32)
    h1 = h1 + jnp.dot(act_bf, w1a_ref[...], preferred_element_type=jnp.float32)
    h1 = jnp.maximum(h1 + b1_ref[...], 0.0)

    # Layer 2.
    h2 = jnp.dot(h1.astype(jnp.bfloat16), w2_ref[...],
                 preferred_element_type=jnp.float32)
    h2 = jnp.maximum(h2 + b2_ref[...], 0.0)

    # Output head: scaled tanh perturbation (tanh in f32 on the EUP slot).
    a = jnp.dot(h2.astype(jnp.bfloat16), w3_ref[...],
                preferred_element_type=jnp.float32)
    a = (threshold * max_action) * jnp.tanh(a + b3_ref[...])

    out = jnp.clip(a + act_f32, -max_action, max_action)
    out_ref[...] = out.astype(out_ref.dtype)


def prepare_actor_params(params, state_dim, *, lane=128):
    """One-time param prep: split w1, zero-pad hidden dims to lane multiples,
    cast weights to bf16 (biases stay f32). Exactly preserves the math."""
    w1, b1 = params["w1"], params["b1"]
    w2, b2 = params["w2"], params["b2"]
    w3, b3 = params["w3"], params["b3"]
    action_dim = w3.shape[1]
    h1, h2 = w1.shape[1], w2.shape[1]
    h1p, h2p = _round_up(h1, lane), _round_up(h2, lane)

    def pad2(x, rows, cols):
        return jnp.pad(x, ((0, rows - x.shape[0]), (0, cols - x.shape[1])))

    w1s = pad2(w1[:state_dim], state_dim, h1p)      # (state_dim, H1p)
    w1a = pad2(w1[state_dim:], w1.shape[0] - state_dim, h1p)  # (action_dim, H1p)
    return {
        "w1s": w1s.astype(jnp.bfloat16),
        "w1a": w1a.astype(jnp.bfloat16),
        "b1": pad2(b1, 1, h1p),
        "w2": pad2(w2, h1p, h2p).astype(jnp.bfloat16),
        "b2": pad2(b2, 1, h2p),
        "w3": pad2(w3, h2p, action_dim).astype(jnp.bfloat16),
        "b3": b3,
    }


def actor_forward(state, action, kparams, *, max_action, threshold,
                  batch_tile=256):
    """Actor forward pass; kparams must come from prepare_actor_params."""
    B, state_dim = state.shape
    _, action_dim = action.shape
    h1p = kparams["w1s"].shape[1]
    h2p = kparams["w2"].shape[1]

    # Batch tiling: tile rows (multiple of 8 sublanes), weights stay resident.
    tile_b = min(batch_tile, _round_up(B, 8))
    pb = _round_up(B, tile_b)
    if pb != B:
        state = jnp.pad(state, ((0, pb - B), (0, 0)))
        action = jnp.pad(action, ((0, pb - B), (0, 0)))
    grid = (pb // tile_b,)

    kernel = functools.partial(_actor_kernel,
                               max_action=float(max_action),
                               threshold=float(threshold))

    def batch_spec(cols):
        return pl.BlockSpec((tile_b, cols), lambda i: (i, 0))

    def resident(arr):
        return pl.BlockSpec(arr.shape, lambda i: (0, 0))

    operands = (state, action,
                kparams["w1s"], kparams["w1a"], kparams["b1"],
                kparams["w2"], kparams["b2"],
                kparams["w3"], kparams["b3"])

    in_specs = [
        batch_spec(state_dim),
        batch_spec(action_dim),
        resident(kparams["w1s"]),
        resident(kparams["w1a"]),
        resident(kparams["b1"]),
        resident(kparams["w2"]),
        resident(kparams["b2"]),
        resident(kparams["w3"]),
        resident(kparams["b3"]),
    ]

    flops = 2 * pb * (state_dim * h1p + action_dim * h1p
                      + h1p * h2p + h2p * action_dim)
    bytes_accessed = int(sum(int(x.size) * x.dtype.itemsize for x in operands)
                         + pb * action_dim * 4)
    cost = pl.CostEstimate(flops=int(flops),
                           transcendentals=int(pb * action_dim),
                           bytes_accessed=bytes_accessed)

    out = pl.pallas_call(
        kernel,
        out_shape=jax.ShapeDtypeStruct((pb, action_dim), jnp.float32),
        grid=grid,
        in_specs=in_specs,
        out_specs=batch_spec(action_dim),
        compiler_params=pltpu.CompilerParams(
            dimension_semantics=("parallel",)),
        cost_estimate=cost,
    )(*operands)
    return out[:B]


def init_actor_params(key, state_dim, action_dim, hidden_dims):
    """Deterministic synthetic parameters (shapes match the PyTorch module),
    stored as (in, out) weights and (1, out) biases, f32."""
    h1, h2 = hidden_dims
    in1 = state_dim + action_dim
    k = jax.random.split(key, 6)

    def lin(kw, kb, fan_in, fan_out):
        bound = 1.0 / jnp.sqrt(fan_in)
        w = jax.random.uniform(kw, (fan_in, fan_out), jnp.float32, -bound, bound)
        b = jax.random.uniform(kb, (1, fan_out), jnp.float32, -bound, bound)
        return w, b

    w1, b1 = lin(k[0], k[1], in1, h1)
    w2, b2 = lin(k[2], k[3], h1, h2)
    w3, b3 = lin(k[4], k[5], h2, action_dim)
    return {"w1": w1, "b1": b1, "w2": w2, "b2": b2, "w3": w3, "b3": b3}


if __name__ == "__main__":
    state_dim = 17
    action_dim = 6
    hidden_dims = [400, 300]   # module defaults
    max_action = 1.0
    threshold = 0.05
    batch = 8

    key = jax.random.PRNGKey(0)
    k_params, k_state, k_action = jax.random.split(key, 3)

    params = init_actor_params(k_params, state_dim, action_dim, hidden_dims)
    kparams = prepare_actor_params(params, state_dim)

    state = jax.random.normal(k_state, (batch, state_dim), jnp.float32)
    action = jnp.tanh(jax.random.normal(k_action, (batch, action_dim), jnp.float32))

    out = actor_forward(state, action, kparams,
                        max_action=max_action, threshold=threshold)
    jax.block_until_ready(out)
    assert out.shape == (batch, action_dim)

    # Reference 1: bf16-matched math (same prepared params) -- tight check.
    sbf = state.astype(jnp.bfloat16)
    abf = action.astype(jnp.bfloat16)
    h = (jnp.dot(sbf, kparams["w1s"], preferred_element_type=jnp.float32)
         + jnp.dot(abf, kparams["w1a"], preferred_element_type=jnp.float32))
    h = jnp.maximum(h + kparams["b1"], 0.0)
    h = jnp.maximum(jnp.dot(h.astype(jnp.bfloat16), kparams["w2"],
                            preferred_element_type=jnp.float32) + kparams["b2"], 0.0)
    a = threshold * max_action * jnp.tanh(
        jnp.dot(h.astype(jnp.bfloat16), kparams["w3"],
                preferred_element_type=jnp.float32) + kparams["b3"])
    ref_bf16 = jnp.clip(a + action, -max_action, max_action)
    assert jnp.allclose(out, ref_bf16, atol=1e-3, rtol=1e-3)

    # Reference 2: original full-f32 module math -- semantics check (bf16 weights
    # introduce a small, bounded deviation; loosen tolerance accordingly).
    sa = jnp.concatenate([state, action], axis=1)
    h = jnp.maximum(sa @ params["w1"] + params["b1"], 0.0)
    h = jnp.maximum(h @ params["w2"] + params["b2"], 0.0)
    a = threshold * max_action * jnp.tanh(h @ params["w3"] + params["b3"])
    ref_f32 = jnp.clip(a + action, -max_action, max_action)
    assert jnp.allclose(out, ref_f32, atol=1e-2, rtol=1e-2)

    print("KERNEL_OK")
</pallas_src>

<mosaic_0001>
module attributes {stable_mosaic.version = 11 : i64} {
  func.func @_actor_kernel(%arg0: i32, %arg1: memref<8x17xf32, #tpu.memory_space<vmem>>, %arg2: memref<8x6xf32, #tpu.memory_space<vmem>>, %arg3: memref<17x512xbf16, #tpu.memory_space<vmem>>, %arg4: memref<6x512xbf16, #tpu.memory_space<vmem>>, %arg5: memref<1x512xf32, #tpu.memory_space<vmem>>, %arg6: memref<512x384xbf16, #tpu.memory_space<vmem>>, %arg7: memref<1x384xf32, #tpu.memory_space<vmem>>, %arg8: memref<384x6xbf16, #tpu.memory_space<vmem>>, %arg9: memref<1x6xf32, #tpu.memory_space<vmem>>, %arg10: memref<8x6xf32, #tpu.memory_space<vmem>>) attributes {dimension_semantics = [#tpu.dimension_semantics<parallel>], iteration_bounds = array<i64: 1>, scalar_prefetch = 0 : i64, scratch_operands = 0 : i64, tpu.core_type = #tpu.core_type<tc>, window_params = [{transform_indices = @transform_0, window_bounds = array<i64: 8, 17>}, {transform_indices = @transform_1, window_bounds = array<i64: 8, 6>}, {pipeline_mode = #tpu.pipeline_mode<synchronous>, transform_indices = @transform_2, window_bounds = array<i64: 17, 512>}, {pipeline_mode = #tpu.pipeline_mode<synchronous>, transform_indices = @transform_3, window_bounds = array<i64: 6, 512>}, {pipeline_mode = #tpu.pipeline_mode<synchronous>, transform_indices = @transform_4, window_bounds = array<i64: 1, 512>}, {pipeline_mode = #tpu.pipeline_mode<synchronous>, transform_indices = @transform_5, window_bounds = array<i64: 512, 384>}, {pipeline_mode = #tpu.pipeline_mode<synchronous>, transform_indices = @transform_6, window_bounds = array<i64: 1, 384>}, {pipeline_mode = #tpu.pipeline_mode<synchronous>, transform_indices = @transform_7, window_bounds = array<i64: 384, 6>}, {pipeline_mode = #tpu.pipeline_mode<synchronous>, transform_indices = @transform_8, window_bounds = array<i64: 1, 6>}, {transform_indices = @transform_9, window_bounds = array<i64: 8, 6>}]} {
    %c0 = arith.constant 0 : index
    %c0_0 = arith.constant 0 : index
    %0 = vector.load %arg2[%c0, %c0_0] : memref<8x6xf32, #tpu.memory_space<vmem>>, vector<8x6xf32>
    %c0_1 = arith.constant 0 : index
    %c0_2 = arith.constant 0 : index
    %1 = vector.load %arg1[%c0_1, %c0_2] : memref<8x17xf32, #tpu.memory_space<vmem>>, vector<8x17xf32>
    %2 = arith.truncf %1 : vector<8x17xf32> to vector<8x17xbf16>
    %3 = arith.truncf %0 : vector<8x6xf32> to vector<8x6xbf16>
    %c0_3 = arith.constant 0 : index
    %c0_4 = arith.constant 0 : index
    %4 = vector.load %arg3[%c0_3, %c0_4] : memref<17x512xbf16, #tpu.memory_space<vmem>>, vector<17x512xbf16>
    %cst = arith.constant dense<0.000000e+00> : vector<8x512xf32>
    %5 = tpu.matmul %2, %4, %cst {dimension_numbers = #tpu.dot_dimension_numbers<[1], [0], [0], [1], [0, 0, 1, 1], [], []>} : vector<8x17xbf16>, vector<17x512xbf16>, vector<8x512xf32> -> vector<8x512xf32>
    %c0_5 = arith.constant 0 : index
    %c0_6 = arith.constant 0 : index
    %6 = vector.load %arg4[%c0_5, %c0_6] : memref<6x512xbf16, #tpu.memory_space<vmem>>, vector<6x512xbf16>
    %cst_7 = arith.constant dense<0.000000e+00> : vector<8x512xf32>
    %7 = tpu.matmul %3, %6, %cst_7 {dimension_numbers = #tpu.dot_dimension_numbers<[1], [0], [0], [1], [0, 0, 1, 1], [], []>} : vector<8x6xbf16>, vector<6x512xbf16>, vector<8x512xf32> -> vector<8x512xf32>
    %8 = arith.addf %5, %7 : vector<8x512xf32>
    %c0_8 = arith.constant 0 : index
    %c0_9 = arith.constant 0 : index
    %9 = vector.load %arg5[%c0_8, %c0_9] : memref<1x512xf32, #tpu.memory_space<vmem>>, vector<1x512xf32>
    %10 = vector.broadcast %9 : vector<1x512xf32> to vector<8x512xf32>
    %11 = arith.addf %8, %10 : vector<8x512xf32>
    %cst_10 = arith.constant 0.000000e+00 : f32
    %12 = vector.broadcast %cst_10 : f32 to vector<8x512xf32>
    %13 = arith.maximumf %11, %12 : vector<8x512xf32>
    %14 = arith.truncf %13 : vector<8x512xf32> to vector<8x512xbf16>
    %c0_11 = arith.constant 0 : index
    %c0_12 = arith.constant 0 : index
    %15 = vector.load %arg6[%c0_11, %c0_12] : memref<512x384xbf16, #tpu.memory_space<vmem>>, vector<512x384xbf16>
    %cst_13 = arith.constant dense<0.000000e+00> : vector<8x384xf32>
    %16 = tpu.matmul %14, %15, %cst_13 {dimension_numbers = #tpu.dot_dimension_numbers<[1], [0], [0], [1], [0, 0, 1, 1], [], []>} : vector<8x512xbf16>, vector<512x384xbf16>, vector<8x384xf32> -> vector<8x384xf32>
    %c0_14 = arith.constant 0 : index
    %c0_15 = arith.constant 0 : index
    %17 = vector.load %arg7[%c0_14, %c0_15] : memref<1x384xf32, #tpu.memory_space<vmem>>, vector<1x384xf32>
    %18 = vector.broadcast %17 : vector<1x384xf32> to vector<8x384xf32>
    %19 = arith.addf %16, %18 : vector<8x384xf32>
    %cst_16 = arith.constant 0.000000e+00 : f32
    %20 = vector.broadcast %cst_16 : f32 to vector<8x384xf32>
    %21 = arith.maximumf %19, %20 : vector<8x384xf32>
    %22 = arith.truncf %21 : vector<8x384xf32> to vector<8x384xbf16>
    %c0_17 = arith.constant 0 : index
    %c0_18 = arith.constant 0 : index
    %23 = vector.load %arg8[%c0_17, %c0_18] : memref<384x6xbf16, #tpu.memory_space<vmem>>, vector<384x6xbf16>
    %cst_19 = arith.constant dense<0.000000e+00> : vector<8x6xf32>
    %24 = tpu.matmul %22, %23, %cst_19 {dimension_numbers = #tpu.dot_dimension_numbers<[1], [0], [0], [1], [0, 0, 1, 1], [], []>} : vector<8x384xbf16>, vector<384x6xbf16>, vector<8x6xf32> -> vector<8x6xf32>
    %c0_20 = arith.constant 0 : index
    %c0_21 = arith.constant 0 : index
    %25 = vector.load %arg9[%c0_20, %c0_21] : memref<1x6xf32, #tpu.memory_space<vmem>>, vector<1x6xf32>
    %26 = vector.broadcast %25 : vector<1x6xf32> to vector<8x6xf32>
    %27 = arith.addf %24, %26 : vector<8x6xf32>
    %28 = math.tanh %27 : vector<8x6xf32>
    %cst_22 = arith.constant 5.000000e-02 : f32
    %29 = vector.broadcast %cst_22 : f32 to vector<8x6xf32>
    %30 = arith.mulf %29, %28 : vector<8x6xf32>
    %31 = arith.addf %30, %0 : vector<8x6xf32>
    %cst_23 = arith.constant -1.000000e+00 : f32
    %cst_24 = arith.constant 1.000000e+00 : f32
    %32 = vector.broadcast %cst_23 : f32 to vector<8x6xf32>
    %33 = arith.maximumf %32, %31 : vector<8x6xf32>
    %34 = vector.broadcast %cst_24 : f32 to vector<8x6xf32>
    %35 = arith.minimumf %34, %33 : vector<8x6xf32>
    %c0_25 = arith.constant 0 : index
    %c0_26 = arith.constant 0 : index
    %36 = vector.load %arg10[%c0_25, %c0_26] : memref<8x6xf32, #tpu.memory_space<vmem>>, vector<8x6xf32>
    tpu.vector_store %arg10[%c0_25, %c0_26], %35 {strides = array<i32>} : memref<8x6xf32, #tpu.memory_space<vmem>>, vector<8x6xf32>,
    return
  }
  func.func @transform_0(%arg0: i32) -> (i32, i32) {
    %c0_i32 = arith.constant 0 : i32
    %c0_i32_0 = arith.constant 0 : i32
    return %arg0, %c0_i32 : i32, i32
  }
  func.func @transform_1(%arg0: i32) -> (i32, i32) {
    %c0_i32 = arith.constant 0 : i32
    %c0_i32_0 = arith.constant 0 : i32
    return %arg0, %c0_i32 : i32, i32
  }
  func.func @transform_2(%arg0: i32) -> (i32, i32) {
    %c0_i32 = arith.constant 0 : i32
    %c0_i32_0 = arith.constant 0 : i32
    %c0_i32_1 = arith.constant 0 : i32
    return %c0_i32, %c0_i32_0 : i32, i32
  }
  func.func @transform_3(%arg0: i32) -> (i32, i32) {
    %c0_i32 = arith.constant 0 : i32
    %c0_i32_0 = arith.constant 0 : i32
    %c0_i32_1 = arith.constant 0 : i32
    return %c0_i32, %c0_i32_0 : i32, i32
  }
  func.func @transform_4(%arg0: i32) -> (i32, i32) {
    %c0_i32 = arith.constant 0 : i32
    %c0_i32_0 = arith.constant 0 : i32
    %c0_i32_1 = arith.constant 0 : i32
    return %c0_i32, %c0_i32_0 : i32, i32
  }
  func.func @transform_5(%arg0: i32) -> (i32, i32) {
    %c0_i32 = arith.constant 0 : i32
    %c0_i32_0 = arith.constant 0 : i32
    %c0_i32_1 = arith.constant 0 : i32
    return %c0_i32, %c0_i32_0 : i32, i32
  }
  func.func @transform_6(%arg0: i32) -> (i32, i32) {
    %c0_i32 = arith.constant 0 : i32
    %c0_i32_0 = arith.constant 0 : i32
    %c0_i32_1 = arith.constant 0 : i32
    return %c0_i32, %c0_i32_0 : i32, i32
  }
  func.func @transform_7(%arg0: i32) -> (i32, i32) {
    %c0_i32 = arith.constant 0 : i32
    %c0_i32_0 = arith.constant 0 : i32
    %c0_i32_1 = arith.constant 0 : i32
    return %c0_i32, %c0_i32_0 : i32, i32
  }
  func.func @transform_8(%arg0: i32) -> (i32, i32) {
    %c0_i32 = arith.constant 0 : i32
    %c0_i32_0 = arith.constant 0 : i32
    %c0_i32_1 = arith.constant 0 : i32
    return %c0_i32, %c0_i32_0 : i32, i32
  }
  func.func @transform_9(%arg0: i32) -> (i32, i32) {
    %c0_i32 = arith.constant 0 : i32
    %c0_i32_0 = arith.constant 0 : i32
    return %arg0, %c0_i32 : i32, i32
  }
}

</mosaic_0001>

<llo_original>
// kernel: tpu_custom_call.1
$region0: #{tpu_custom_call.1}
  #allocation0 [shape = 'u32[]', space=smem, size = 0x4, offset = 0x4, fixed_abs, tag = 'smem constant byte address 0x4 - core index']
  #allocation1 [shape = 'u32[144,128]{1,0:T(1,128)}', space=vmem, size = 0x12000, scoped, tag = 'internal scratch']
  %s0 = inlined_call_operand.vmem [shape: f32[8,17], index: 0, kind: input, shape index: {}]
  %s1 = inlined_call_operand.vmem [shape: f32[8,6], index: 1, kind: input, shape index: {}]
  %s2 = inlined_call_operand.vmem [shape: bf16[17,512], index: 2, kind: input, shape index: {}]
  %s3 = inlined_call_operand.vmem [shape: bf16[6,512], index: 3, kind: input, shape index: {}]
  %s4 = inlined_call_operand.vmem [shape: f32[1,512], index: 4, kind: input, shape index: {}]
  %s5 = inlined_call_operand.hbm [shape: bf16[512,384], index: 5, kind: input, shape index: {}]
  %s6 = inlined_call_operand.vmem [shape: f32[1,384], index: 6, kind: input, shape index: {}]
  %s7 = inlined_call_operand.vmem [shape: bf16[384,6], index: 7, kind: input, shape index: {}]
  %s8 = inlined_call_operand.vmem [shape: f32[1,6], index: 8, kind: input, shape index: {}]
  %s9 = inlined_call_operand.hbm [shape: f32[8,6], index: 9, kind: output, shape index: {}]
  %s10 = sld [smem:[#allocation0]]
  $region50: #{tpu_custom_call.1} parent=0
    _
  %s12 = ssub.s32 1, %s10
  %s13 = scalar_select 0, %s12, %s10
  $region1: #{tpu_custom_call.1} parent=0
    #allocation2 [shape = 'u8[393216]{0}', space=vmem, size = 0x60000, scoped, tag = 'input window, operand 5, single buffered']
    #allocation3 [shape = 's32[1]{0}', space=sflag, size = 0x4, scoped, tag = 'scoped memory for tpu_custom_call.1']
    #allocation4 [shape = 's32[1]{0}', space=sflag, size = 0x4, scoped, tag = 'scoped memory for tpu_custom_call.1']
    #allocation5 [shape = 'u8[4096]{0}', space=vmem, size = 0x1000, scoped, tag = 'output window, operand 0, single buffered']
    %14 = vsyncpa [#allocation3], 0
    %15 = vsyncpa [#allocation4], 0
    // Predicated region
    $region2: #{tpu_custom_call.1} parent=1 // pred_check
      _
    $region3: #{tpu_custom_call.1} parent=1 // pred_check_branch
      %17 = sbr.rel (0) target = $region5
    $region4: #{tpu_custom_call.1} parent=1 // pred_region
      _
    $region5: #{tpu_custom_call.1} parent=1 // pred_fallthru
      _
    // Predicated region
    $region6: #{tpu_custom_call.1} parent=1 // pred_check
      _
    $region7: #{tpu_custom_call.1} parent=1 // pred_check_branch
      %19 = sbr.rel (0) target = $region9
    $region8: #{tpu_custom_call.1} parent=1 // pred_region
      _
    $region9: #{tpu_custom_call.1} parent=1 // pred_fallthru
      _
    // Predicated region
    $region10: #{tpu_custom_call.1} parent=1 // pred_check
      _
    $region11: #{tpu_custom_call.1} parent=1 // pred_check_branch
      %21 = sbr.rel (0) target = $region13
    $region12: #{tpu_custom_call.1} parent=1 // pred_region
      _
    $region13: #{tpu_custom_call.1} parent=1 // pred_fallthru
      _
    // Predicated region
    $region14: #{tpu_custom_call.1} parent=1 // pred_check
      _
    $region15: #{tpu_custom_call.1} parent=1 // pred_check_branch
      %23 = sbr.rel (0) target = $region17
    $region16: #{tpu_custom_call.1} parent=1 // pred_region
      _
    $region17: #{tpu_custom_call.1} parent=1 // pred_fallthru
      _
    // Predicated region
    $region18: #{tpu_custom_call.1} parent=1 // pred_check
      _
    $region19: #{tpu_custom_call.1} parent=1 // pred_check_branch
      %25 = sbr.rel (0) target = $region21
    $region20: #{tpu_custom_call.1} parent=1 // pred_region
      _
    $region21: #{tpu_custom_call.1} parent=1 // pred_fallthru
      _
    // Predicated region
    $region22: #{tpu_custom_call.1} parent=1 // pred_check
      _
    $region23: #{tpu_custom_call.1} parent=1 // pred_check_branch
      %27 = sbr.rel (0) target = $region25
    $region24: #{tpu_custom_call.1} parent=1 // pred_region
      %s29 = ssub.s32 12288, 12288
      %30 = vsyncadd [#allocation3], %s29
      %s31 = sshll.u32 [#allocation2], 4
      %s32 = int_to_ptr.vmem [resolvable:$true] %s31
      %37 = dma.hbm_to_vmem [thread:$0]  %s5, 12288, %s32, [#allocation3], 192, 192, 12
    $region25: #{tpu_custom_call.1} parent=1 // pred_fallthru
      _
    // Predicated region
    $region26: #{tpu_custom_call.1} parent=1 // pred_check
      _
    $region27: #{tpu_custom_call.1} parent=1 // pred_check_branch
      %39 = sbr.rel (0) target = $region29
    $region28: #{tpu_custom_call.1} parent=1 // pred_region
      _
    $region29: #{tpu_custom_call.1} parent=1 // pred_fallthru
      _
    // Predicated region
    $region30: #{tpu_custom_call.1} parent=1 // pred_check
      _
    $region31: #{tpu_custom_call.1} parent=1 // pred_check_branch
      %41 = sbr.rel (0) target = $region33
    $region32: #{tpu_custom_call.1} parent=1 // pred_region
      _
    $region33: #{tpu_custom_call.1} parent=1 // pred_fallthru
      _
    // Predicated region
    $region34: #{tpu_custom_call.1} parent=1 // pred_check
      _
    $region35: #{tpu_custom_call.1} parent=1 // pred_check_branch
      %43 = sbr.rel (0) target = $region37
    $region36: #{tpu_custom_call.1} parent=1 // pred_region
      _
    $region37: #{tpu_custom_call.1} parent=1 // pred_fallthru
      _
    // Predicated region
    $region38: #{tpu_custom_call.1} parent=1 // pred_check
      _
    $region39: #{tpu_custom_call.1} parent=1 // pred_check_branch
      %45 = sbr.rel (0) target = $region41
    $region40: #{tpu_custom_call.1} parent=1 // pred_region
      %46 = dma.done [#allocation3], 12288
    $region41: #{tpu_custom_call.1} parent=1 // pred_fallthru
      _
    %v48 = vld [vmem:[%s1] sm:$0xff]
    %v49 = vld [vmem:[%s0] sm:$0xff]
    %v50 = vpack.c.bf16 %v49, %v49
    %v51 = vpack.c.bf16 %v48, %v48
    %v52 = vld [vmem:[%s2] sm:$0xff]
    %v53 = vld [vmem:[%s2 + $0x8] sm:$0xff]
    %v54 = vld [vmem:[%s2 + $0x10] sm:$0xff]
    %v55 = vld [vmem:[%s2 + $0x18] sm:$0xff]
    %v56 = vld [vmem:[%s2 + $0x20] sm:$0x11]
    %v57 = vld [vmem:[%s2 + $0x28] sm:$0x11]
    %v58 = vld [vmem:[%s3] sm:$0x77]
    %v59 = vld [vmem:[%s3 + $0x8] sm:$0x77]
    %v62 = vunpack.c.l.b16 %v58
    %v63 = vunpack.c.h.b16 %v58
    %v64 = vunpack.c.l.b16 %v59
    %v65 = vunpack.c.h.b16 %v59
    %v66 = vpack.c.b16 %v62, %v62
    %v67 = vpack.c.b16 %v63, %v63
    %v68 = vpack.c.b16 %v64, %v64
    %v69 = vpack.c.b16 %v65, %v65
    %vm70 = vcmask 48128
    %v72 = vsel %vm70, %v51, 0
    %vm74 = vcmask 1042432
    %v76 = vsel %vm74, %v66, 0
    %v79 = vsel %vm74, %v67, 0
    %v82 = vsel %vm74, %v68, 0
    %v85 = vsel %vm74, %v69, 0
    %87 = vmatprep.subr.bf16.mxu0 %v79
    %88 = vmatpush1.bf16.msra.mxu0 %v76
    %89 = vmatprep.subr.bf16.mxu0 0
    %90 = vmatpush1.bf16.msra.mxu0 0
    %91 = vmatprep.subr.bf16.mxu0 0
    %92 = vmatpush1.bf16.msra.mxu0 0
    %93 = vmatprep.subr.bf16.mxu0 0
    %94 = vmatpush1.bf16.msra.mxu0 0
    %95 = vmatprep.subr.bf16.mxu0 0
    %96 = vmatpush1.bf16.msra.mxu0 0
    %97 = vmatprep.subr.bf16.mxu0 0
    %98 = vmatpush1.bf16.msra.mxu0 0
    %99 = vmatprep.subr.bf16.mxu0 0
    %100 = vmatpush1.bf16.msra.mxu0 0
    %101 = vmatprep.subr.bf16.mxu0 0
    %102 = vmatpush1.bf16.msra.mxu0 0
    %103 = vmatprep.subr.bf16.mxu0 0
    %104 = vmatpush1.bf16.msra.mxu0 0
    %105 = vmatprep.subr.bf16.mxu0 0
    %106 = vmatpush1.bf16.msra.mxu0 0
    %107 = vmatprep.subr.bf16.mxu0 0
    %108 = vmatpush1.bf16.msra.mxu0 0
    %109 = vmatprep.subr.bf16.mxu0 0
    %110 = vmatpush1.bf16.msra.mxu0 0
    %111 = vmatprep.subr.bf16.mxu0 0
    %112 = vmatpush1.bf16.msra.mxu0 0
    %113 = vmatprep.subr.bf16.mxu0 0
    %114 = vmatpush1.bf16.msra.mxu0 0
    %115 = vmatprep.subr.bf16.mxu0 0
    %116 = vmatpush1.bf16.msra.mxu0 0
    %117 = vmatprep.subr.bf16.mxu0 0
    %118 = vmatpush1.bf16.msra.mxu0 0
    %119 = vmatprep.mubr.bf16.mxu0 0
    %120 = vmatmul.mubr.bf16.gmra.mrb[0].mxu0 %v72
    %v121 = vpop.f32.mrb[0].mxu0
    %v122 = vadd.f32 0.0, %v121
    %v123 = vpop.f32.mrb[0].mxu0
    %v124 = vadd.f32 0.0, %v123
    %v125 = vpop.f32.mrb[0].mxu0
    %v126 = vpop.f32.mrb[0].mxu0
    %127 = vdwg.mxu0
    %128 = vmatprep.subr.bf16.mxu0 %v85
    %129 = vmatpush1.bf16.msra.mxu0 %v82
    %130 = vmatprep.subr.bf16.mxu0 0
    %131 = vmatpush1.bf16.msra.mxu0 0
    %132 = vmatprep.subr.bf16.mxu0 0
    %133 = vmatpush1.bf16.msra.mxu0 0
    %134 = vmatprep.subr.bf16.mxu0 0
    %135 = vmatpush1.bf16.msra.mxu0 0
    %136 = vmatprep.subr.bf16.mxu0 0
    %137 = vmatpush1.bf16.msra.mxu0 0
    %138 = vmatprep.subr.bf16.mxu0 0
    %139 = vmatpush1.bf16.msra.mxu0 0
    %140 = vmatprep.subr.bf16.mxu0 0
    %141 = vmatpush1.bf16.msra.mxu0 0
    %142 = vmatprep.subr.bf16.mxu0 0
    %143 = vmatpush1.bf16.msra.mxu0 0
    %144 = vmatprep.subr.bf16.mxu0 0
    %145 = vmatpush1.bf16.msra.mxu0 0
    %146 = vmatprep.subr.bf16.mxu0 0
    %147 = vmatpush1.bf16.msra.mxu0 0
    %148 = vmatprep.subr.bf16.mxu0 0
    %149 = vmatpush1.bf16.msra.mxu0 0
    %150 = vmatprep.subr.bf16.mxu0 0
    %151 = vmatpush1.bf16.msra.mxu0 0
    %152 = vmatprep.subr.bf16.mxu0 0
    %153 = vmatpush1.bf16.msra.mxu0 0
    %154 = vmatprep.subr.bf16.mxu0 0
    %155 = vmatpush1.bf16.msra.mxu0 0
    %156 = vmatprep.subr.bf16.mxu0 0
    %157 = vmatpush1.bf16.msra.mxu0 0
    %158 = vmatprep.subr.bf16.mxu0 0
    %159 = vmatpush1.bf16.msra.mxu0 0
    %160 = vmatprep.mubr.bf16.mxu0 0
    %161 = vmatmul.mubr.bf16.gmra.mrb[0].mxu0 %v72
    %v162 = vpop.f32.mrb[0].mxu0
    %v163 = vadd.f32 0.0, %v162
    %v164 = vpop.f32.mrb[0].mxu0
    %v165 = vadd.f32 0.0, %v164
    %v166 = vpop.f32.mrb[0].mxu0
    %v167 = vpop.f32.mrb[0].mxu0
    %168 = vdwg.mxu0
    %v175 = vunpack.c.l.b16 %v52
    %v176 = vunpack.c.h.b16 %v52
    %v177 = vunpack.c.l.b16 %v53
    %v178 = vunpack.c.h.b16 %v53
    %v179 = vunpack.c.l.b16 %v54
    %v180 = vunpack.c.h.b16 %v54
    %v181 = vunpack.c.l.b16 %v55
    %v182 = vunpack.c.h.b16 %v55
    %v183 = vunpack.c.l.b16 %v56
    %v184 = vunpack.c.h.b16 %v56
    %v185 = vunpack.c.l.b16 %v57
    %v186 = vunpack.c.h.b16 %v57
    %v187 = vpack.c.b16 %v179, %v175
    %v188 = vpack.c.b16 %v180, %v176
    %v189 = vpack.c.b16 %v181, %v177
    %v190 = vpack.c.b16 %v182, %v178
    %v191 = vpack.c.b16 %v183, %v183
    %v192 = vpack.c.b16 %v184, %v184
    %v193 = vpack.c.b16 %v185, %v185
    %v194 = vpack.c.b16 %v186, %v186
    %vm199 = vcmask 138240
    %v201 = vsel %vm199, %v50, 0
    %vm203 = vcmask 1040384
    %v204 = vsel 0, 4294967295, 65535
    %v205 = vsel %vm203, %v204, 0
    %v207 = vand.u32 %v191, %v205
    %v210 = vand.u32 %v192, %v205
    %v213 = vand.u32 %v193, %v205
    %v216 = vand.u32 %v194, %v205
    %218 = vmatprep.subr.bf16.mxu0 %v188
    %219 = vmatpush1.bf16.msra.mxu0 %v187
    %220 = vmatprep.subr.bf16.mxu0 %v210
    %221 = vmatpush1.bf16.msra.mxu0 %v207
    %222 = vmatprep.subr.bf16.mxu0 0
    %223 = vmatpush1.bf16.msra.mxu0 0
    %224 = vmatprep.subr.bf16.mxu0 0
    %225 = vmatpush1.bf16.msra.mxu0 0
    %226 = vmatprep.subr.bf16.mxu0 0
    %227 = vmatpush1.bf16.msra.mxu0 0
    %228 = vmatprep.subr.bf16.mxu0 0
    %229 = vmatpush1.bf16.msra.mxu0 0
    %230 = vmatprep.subr.bf16.mxu0 0
    %231 = vmatpush1.bf16.msra.mxu0 0
    %232 = vmatprep.subr.bf16.mxu0 0
    %233 = vmatpush1.bf16.msra.mxu0 0
    %234 = vmatprep.subr.bf16.mxu0 0
    %235 = vmatpush1.bf16.msra.mxu0 0
    %236 = vmatprep.subr.bf16.mxu0 0
    %237 = vmatpush1.bf16.msra.mxu0 0
    %238 = vmatprep.subr.bf16.mxu0 0
    %239 = vmatpush1.bf16.msra.mxu0 0
    %240 = vmatprep.subr.bf16.mxu0 0
    %241 = vmatpush1.bf16.msra.mxu0 0
    %242 = vmatprep.subr.bf16.mxu0 0
    %243 = vmatpush1.bf16.msra.mxu0 0
    %244 = vmatprep.subr.bf16.mxu0 0
    %245 = vmatpush1.bf16.msra.mxu0 0
    %246 = vmatprep.subr.bf16.mxu0 0
    %247 = vmatpush1.bf16.msra.mxu0 0
    %248 = vmatprep.subr.bf16.mxu0 0
    %249 = vmatpush1.bf16.msra.mxu0 0
    %250 = vmatprep.mubr.bf16.mxu0 0
    %251 = vmatmul.mubr.bf16.gmra.mrb[0].mxu0 %v201
    %v252 = vpop.f32.mrb[0].mxu0
    %v253 = vadd.f32 %v122, %v252
    %v254 = vpop.f32.mrb[0].mxu0
    %v255 = vadd.f32 %v124, %v254
    %v256 = vpop.f32.mrb[0].mxu0
    %v257 = vpop.f32.mrb[0].mxu0
    %258 = vdwg.mxu0
    %259 = vmatprep.subr.bf16.mxu0 %v190
    %260 = vmatpush1.bf16.msra.mxu0 %v189
    %261 = vmatprep.subr.bf16.mxu0 %v216
    %262 = vmatpush1.bf16.msra.mxu0 %v213
    %263 = vmatprep.subr.bf16.mxu0 0
    %264 = vmatpush1.bf16.msra.mxu0 0
    %265 = vmatprep.subr.bf16.mxu0 0
    %266 = vmatpush1.bf16.msra.mxu0 0
    %267 = vmatprep.subr.bf16.mxu0 0
    %268 = vmatpush1.bf16.msra.mxu0 0
    %269 = vmatprep.subr.bf16.mxu0 0
    %270 = vmatpush1.bf16.msra.mxu0 0
    %271 = vmatprep.subr.bf16.mxu0 0
    %272 = vmatpush1.bf16.msra.mxu0 0
    %273 = vmatprep.subr.bf16.mxu0 0
    %274 = vmatpush1.bf16.msra.mxu0 0
    %275 = vmatprep.subr.bf16.mxu0 0
    %276 = vmatpush1.bf16.msra.mxu0 0
    %277 = vmatprep.subr.bf16.mxu0 0
    %278 = vmatpush1.bf16.msra.mxu0 0
    %279 = vmatprep.subr.bf16.mxu0 0
    %280 = vmatpush1.bf16.msra.mxu0 0
    %281 = vmatprep.subr.bf16.mxu0 0
    %282 = vmatpush1.bf16.msra.mxu0 0
    %283 = vmatprep.subr.bf16.mxu0 0
    %284 = vmatpush1.bf16.msra.mxu0 0
    %285 = vmatprep.subr.bf16.mxu0 0
    %286 = vmatpush1.bf16.msra.mxu0 0
    %287 = vmatprep.subr.bf16.mxu0 0
    %288 = vmatpush1.bf16.msra.mxu0 0
    %289 = vmatprep.subr.bf16.mxu0 0
    %290 = vmatpush1.bf16.msra.mxu0 0
    %291 = vmatprep.mubr.bf16.mxu0 0
    %292 = vmatmul.mubr.bf16.gmra.mrb[0].mxu0 %v201
    %v293 = vpop.f32.mrb[0].mxu0
    %v294 = vadd.f32 %v163, %v293
    %v295 = vpop.f32.mrb[0].mxu0
    %v296 = vadd.f32 %v165, %v295
    %v297 = vpop.f32.mrb[0].mxu0
    %v298 = vpop.f32.mrb[0].mxu0
    %299 = vdwg.mxu0
    %v300 = vld [vmem:[%s4] sm:$0xf]
    %v302 = vlaneseq
    %v303 = vshrl.u32 %v302, 7
    %v304 = vsub.s32 0, %v303
    %v305 = vrot.slane %v300, %v304
    %v306 = vlaneseq
    %v307 = vshrl.u32 %v306, 7
    %v308 = vsub.s32 1, %v307
    %v309 = vrot.slane %v300, %v308
    %v310 = vlaneseq
    %v311 = vshrl.u32 %v310, 7
    %v312 = vsub.s32 2, %v311
    %v313 = vrot.slane %v300, %v312
    %v314 = vlaneseq
    %v315 = vshrl.u32 %v314, 7
    %v316 = vsub.s32 3, %v315
    %v317 = vrot.slane %v300, %v316
    %v322 = vadd.f32 %v253, %v305
    %v323 = vadd.f32 %v255, %v309
    %v324 = vadd.f32 %v294, %v313
    %v325 = vadd.f32 %v296, %v317
    %v326 = vmax.f32 %v322, 0.0
    %v327 = vmax.f32 %v323, 0.0
    %v328 = vmax.f32 %v324, 0.0
    %v329 = vmax.f32 %v325, 0.0
    %v330 = vpack.c.bf16 %v326, %v326
    %v331 = vpack.c.bf16 %v327, %v327
    %v332 = vpack.c.bf16 %v328, %v328
    %v333 = vpack.c.bf16 %v329, %v329
    %v334 = vld [vmem:[#allocation2] sm:$0xff]
    %v335 = vld [vmem:[#allocation2 + $0x8] sm:$0xf]
    %v336 = vld [vmem:[#allocation2 + $0xc] sm:$0xff]
    %v337 = vld [vmem:[#allocation2 + $0x14] sm:$0xf]
    %v338 = vld [vmem:[#allocation2 + $0x18] sm:$0xff]
    %v339 = vld [vmem:[#allocation2 + $0x20] sm:$0xf]
    %v340 = vld [vmem:[#allocation2 + $0x24] sm:$0xff]
    %v341 = vld [vmem:[#allocation2 + $0x2c] sm:$0xf]
    %v342 = vld [vmem:[#allocation2 + $0x30] sm:$0xff]
    %v343 = vld [vmem:[#allocation2 + $0x38] sm:$0xf]
    %v344 = vld [vmem:[#allocation2 + $0x3c] sm:$0xff]
    %v345 = vld [vmem:[#allocation2 + $0x44] sm:$0xf]
    %v346 = vld [vmem:[#allocation2 + $0x48] sm:$0xff]
    %v347 = vld [vmem:[#allocation2 + $0x50] sm:$0xf]
    %v348 = vld [vmem:[#allocation2 + $0x54] sm:$0xff]
    %v349 = vld [vmem:[#allocation2 + $0x5c] sm:$0xf]
    %v350 = vld [vmem:[#allocation2 + $0x60] sm:$0xff]
    %v351 = vld [vmem:[#allocation2 + $0x68] sm:$0xf]
    %v352 = vld [vmem:[#allocation2 + $0x6c] sm:$0xff]
    %v353 = vld [vmem:[#allocation2 + $0x74] sm:$0xf]
    %v354 = vld [vmem:[#allocation2 + $0x78] sm:$0xff]
    %v355 = vld [vmem:[#allocation2 + $0x80] sm:$0xf]
    %v356 = vld [vmem:[#allocation2 + $0x84] sm:$0xff]
    %v357 = vld [vmem:[#allocation2 + $0x8c] sm:$0xf]
    %v358 = vld [vmem:[#allocation2 + $0x90] sm:$0xff]
    %v359 = vld [vmem:[#allocation2 + $0x98] sm:$0xf]
    %v360 = vld [vmem:[#allocation2 + $0x9c] sm:$0xff]
    %v361 = vld [vmem:[#allocation2 + $0xa4] sm:$0xf]
    %v362 = vld [vmem:[#allocation2 + $0xa8] sm:$0xff]
    %v363 = vld [vmem:[#allocation2 + $0xb0] sm:$0xf]
    %v364 = vld [vmem:[#allocation2 + $0xb4] sm:$0xff]
    %v365 = vld [vmem:[#allocation2 + $0xbc] sm:$0xf]
    %v366 = vld [vmem:[#allocation2 + $0xc0] sm:$0xff]
    %v367 = vld [vmem:[#allocation2 + $0xc8] sm:$0xf]
    %v368 = vld [vmem:[#allocation2 + $0xcc] sm:$0xff]
    %v369 = vld [vmem:[#allocation2 + $0xd4] sm:$0xf]
    %v370 = vld [vmem:[#allocation2 + $0xd8] sm:$0xff]
    %v371 = vld [vmem:[#allocation2 + $0xe0] sm:$0xf]
    %v372 = vld [vmem:[#allocation2 + $0xe4] sm:$0xff]
    %v373 = vld [vmem:[#allocation2 + $0xec] sm:$0xf]
    %v374 = vld [vmem:[#allocation2 + $0xf0] sm:$0xff]
    %v375 = vld [vmem:[#allocation2 + $0xf8] sm:$0xf]
    %v376 = vld [vmem:[#allocation2 + $0xfc] sm:$0xff]
    %v377 = vld [vmem:[#allocation2 + $0x104] sm:$0xf]
    %v378 = vld [vmem:[#allocation2 + $0x108] sm:$0xff]
    %v379 = vld [vmem:[#allocation2 + $0x110] sm:$0xf]
    %v380 = vld [vmem:[#allocation2 + $0x114] sm:$0xff]
    %v381 = vld [vmem:[#allocation2 + $0x11c] sm:$0xf]
    %v382 = vld [vmem:[#allocation2 + $0x120] sm:$0xff]
    %v383 = vld [vmem:[#allocation2 + $0x128] sm:$0xf]
    %v384 = vld [vmem:[#allocation2 + $0x12c] sm:$0xff]
    %v385 = vld [vmem:[#allocation2 + $0x134] sm:$0xf]
    %v386 = vld [vmem:[#allocation2 + $0x138] sm:$0xff]
    %v387 = vld [vmem:[#allocation2 + $0x140] sm:$0xf]
    %v388 = vld [vmem:[#allocation2 + $0x144] sm:$0xff]
    %v389 = vld [vmem:[#allocation2 + $0x14c] sm:$0xf]
    %v390 = vld [vmem:[#allocation2 + $0x150] sm:$0xff]
    %v391 = vld [vmem:[#allocation2 + $0x158] sm:$0xf]
    %v392 = vld [vmem:[#allocation2 + $0x15c] sm:$0xff]
    %v393 = vld [vmem:[#allocation2 + $0x164] sm:$0xf]
    %v394 = vld [vmem:[#allocation2 + $0x168] sm:$0xff]
    %v395 = vld [vmem:[#allocation2 + $0x170] sm:$0xf]
    %v396 = vld [vmem:[#allocation2 + $0x174] sm:$0xff]
    %v397 = vld [vmem:[#allocation2 + $0x17c] sm:$0xf]
    %v398 = vld [vmem:[#allocation2 + $0x180] sm:$0xff]
    %v399 = vld [vmem:[#allocation2 + $0x188] sm:$0xf]
    %v400 = vld [vmem:[#allocation2 + $0x18c] sm:$0xff]
    %v401 = vld [vmem:[#allocation2 + $0x194] sm:$0xf]
    %v402 = vld [vmem:[#allocation2 + $0x198] sm:$0xff]
    %v403 = vld [vmem:[#allocation2 + $0x1a0] sm:$0xf]
    %v404 = vld [vmem:[#allocation2 + $0x1a4] sm:$0xff]
    %v405 = vld [vmem:[#allocation2 + $0x1ac] sm:$0xf]
    %v406 = vld [vmem:[#allocation2 + $0x1b0] sm:$0xff]
    %v407 = vld [vmem:[#allocation2 + $0x1b8] sm:$0xf]
    %v408 = vld [vmem:[#allocation2 + $0x1bc] sm:$0xff]
    %v409 = vld [vmem:[#allocation2 + $0x1c4] sm:$0xf]
    %v410 = vld [vmem:[#allocation2 + $0x1c8] sm:$0xff]
    %v411 = vld [vmem:[#allocation2 + $0x1d0] sm:$0xf]
    %v412 = vld [vmem:[#allocation2 + $0x1d4] sm:$0xff]
    %v413 = vld [vmem:[#allocation2 + $0x1dc] sm:$0xf]
    %v414 = vld [vmem:[#allocation2 + $0x1e0] sm:$0xff]
    %v415 = vld [vmem:[#allocation2 + $0x1e8] sm:$0xf]
    %v416 = vld [vmem:[#allocation2 + $0x1ec] sm:$0xff]
    %v417 = vld [vmem:[#allocation2 + $0x1f4] sm:$0xf]
    %v418 = vld [vmem:[#allocation2 + $0x1f8] sm:$0xff]
    %v419 = vld [vmem:[#allocation2 + $0x200] sm:$0xf]
    %v420 = vld [vmem:[#allocation2 + $0x204] sm:$0xff]
    %v421 = vld [vmem:[#allocation2 + $0x20c] sm:$0xf]
    %v422 = vld [vmem:[#allocation2 + $0x210] sm:$0xff]
    %v423 = vld [vmem:[#allocation2 + $0x218] sm:$0xf]
    %v424 = vld [vmem:[#allocation2 + $0x21c] sm:$0xff]
    %v425 = vld [vmem:[#allocation2 + $0x224] sm:$0xf]
    %v426 = vld [vmem:[#allocation2 + $0x228] sm:$0xff]
    %v427 = vld [vmem:[#allocation2 + $0x230] sm:$0xf]
    %v428 = vld [vmem:[#allocation2 + $0x234] sm:$0xff]
    %v429 = vld [vmem:[#allocation2 + $0x23c] sm:$0xf]
    %v430 = vld [vmem:[#allocation2 + $0x240] sm:$0xff]
    %v431 = vld [vmem:[#allocation2 + $0x248] sm:$0xf]
    %v432 = vld [vmem:[#allocation2 + $0x24c] sm:$0xff]
    %v433 = vld [vmem:[#allocation2 + $0x254] sm:$0xf]
    %v434 = vld [vmem:[#allocation2 + $0x258] sm:$0xff]
    %v435 = vld [vmem:[#allocation2 + $0x260] sm:$0xf]
    %v436 = vld [vmem:[#allocation2 + $0x264] sm:$0xff]
    %v437 = vld [vmem:[#allocation2 + $0x26c] sm:$0xf]
    %v438 = vld [vmem:[#allocation2 + $0x270] sm:$0xff]
    %v439 = vld [vmem:[#allocation2 + $0x278] sm:$0xf]
    %v440 = vld [vmem:[#allocation2 + $0x27c] sm:$0xff]
    %v441 = vld [vmem:[#allocation2 + $0x284] sm:$0xf]
    %v442 = vld [vmem:[#allocation2 + $0x288] sm:$0xff]
    %v443 = vld [vmem:[#allocation2 + $0x290] sm:$0xf]
    %v444 = vld [vmem:[#allocation2 + $0x294] sm:$0xff]
    %v445 = vld [vmem:[#allocation2 + $0x29c] sm:$0xf]
    %v446 = vld [vmem:[#allocation2 + $0x2a0] sm:$0xff]
    %v447 = vld [vmem:[#allocation2 + $0x2a8] sm:$0xf]
    %v448 = vld [vmem:[#allocation2 + $0x2ac] sm:$0xff]
    %v449 = vld [vmem:[#allocation2 + $0x2b4] sm:$0xf]
    %v450 = vld [vmem:[#allocation2 + $0x2b8] sm:$0xff]
    %v451 = vld [vmem:[#allocation2 + $0x2c0] sm:$0xf]
    %v452 = vld [vmem:[#allocation2 + $0x2c4] sm:$0xff]
    %v453 = vld [vmem:[#allocation2 + $0x2cc] sm:$0xf]
    %v454 = vld [vmem:[#allocation2 + $0x2d0] sm:$0xff]
    %v455 = vld [vmem:[#allocation2 + $0x2d8] sm:$0xf]
    %v456 = vld [vmem:[#allocation2 + $0x2dc] sm:$0xff]
    %v457 = vld [vmem:[#allocation2 + $0x2e4] sm:$0xf]
    %v458 = vld [vmem:[#allocation2 + $0x2e8] sm:$0xff]
    %v459 = vld [vmem:[#allocation2 + $0x2f0] sm:$0xf]
    %v460 = vld [vmem:[#allocation2 + $0x2f4] sm:$0xff]
    %v461 = vld [vmem:[#allocation2 + $0x2fc] sm:$0xf]
    %v462 = vld [vmem:[%s6] sm:$0x7]
    %v464 = vlaneseq
    %v465 = vshrl.u32 %v464, 7
    %v466 = vsub.s32 0, %v465
    %v467 = vrot.slane %v462, %v466
    %v468 = vlaneseq
    %v469 = vshrl.u32 %v468, 7
    %v470 = vsub.s32 1, %v469
    %v471 = vrot.slane %v462, %v470
    %v472 = vlaneseq
    %v473 = vshrl.u32 %v472, 7
    %v474 = vsub.s32 2, %v473
    %v475 = vrot.slane %v462, %v474
    %v607 = vunpack.c.l.b16 %v334
    %v608 = vunpack.c.h.b16 %v334
    %v609 = vunpack.c.l.b16 %v335
    %v610 = vunpack.c.l.b16 %v336
    %v611 = vunpack.c.h.b16 %v336
    %v612 = vunpack.c.l.b16 %v337
    %v613 = vunpack.c.l.b16 %v338
    %v614 = vunpack.c.h.b16 %v338
    %v615 = vunpack.c.l.b16 %v339
    %v616 = vunpack.c.l.b16 %v340
    %v617 = vunpack.c.h.b16 %v340
    %v618 = vunpack.c.l.b16 %v341
    %v619 = vunpack.c.l.b16 %v342
    %v620 = vunpack.c.h.b16 %v342
    %v621 = vunpack.c.l.b16 %v343
    %v622 = vunpack.c.l.b16 %v344
    %v623 = vunpack.c.h.b16 %v344
    %v624 = vunpack.c.l.b16 %v345
    %v625 = vunpack.c.l.b16 %v346
    %v626 = vunpack.c.h.b16 %v346
    %v627 = vunpack.c.l.b16 %v347
    %v628 = vunpack.c.l.b16 %v348
    %v629 = vunpack.c.h.b16 %v348
    %v630 = vunpack.c.l.b16 %v349
    %v631 = vunpack.c.l.b16 %v350
    %v632 = vunpack.c.h.b16 %v350
    %v633 = vunpack.c.l.b16 %v351
    %v634 = vunpack.c.l.b16 %v352
    %v635 = vunpack.c.h.b16 %v352
    %v636 = vunpack.c.l.b16 %v353
    %v637 = vunpack.c.l.b16 %v354
    %v638 = vunpack.c.h.b16 %v354
    %v639 = vunpack.c.l.b16 %v355
    %v640 = vunpack.c.l.b16 %v356
    %v641 = vunpack.c.h.b16 %v356
    %v642 = vunpack.c.l.b16 %v357
    %v643 = vunpack.c.l.b16 %v358
    %v644 = vunpack.c.h.b16 %v358
    %v645 = vunpack.c.l.b16 %v359
    %v646 = vunpack.c.l.b16 %v360
    %v647 = vunpack.c.h.b16 %v360
    %v648 = vunpack.c.l.b16 %v361
    %v649 = vunpack.c.l.b16 %v362
    %v650 = vunpack.c.h.b16 %v362
    %v651 = vunpack.c.l.b16 %v363
    %v652 = vunpack.c.l.b16 %v364
    %v653 = vunpack.c.h.b16 %v364
    %v654 = vunpack.c.l.b16 %v365
    %v655 = vunpack.c.l.b16 %v366
    %v656 = vunpack.c.h.b16 %v366
    %v657 = vunpack.c.l.b16 %v367
    %v658 = vunpack.c.l.b16 %v368
    %v659 = vunpack.c.h.b16 %v368
    %v660 = vunpack.c.l.b16 %v369
    %v661 = vunpack.c.l.b16 %v370
    %v662 = vunpack.c.h.b16 %v370
    %v663 = vunpack.c.l.b16 %v371
    %v664 = vunpack.c.l.b16 %v372
    %v665 = vunpack.c.h.b16 %v372
    %v666 = vunpack.c.l.b16 %v373
    %v667 = vunpack.c.l.b16 %v374
    %v668 = vunpack.c.h.b16 %v374
    %v669 = vunpack.c.l.b16 %v375
    %v670 = vunpack.c.l.b16 %v376
    %v671 = vunpack.c.h.b16 %v376
    %v672 = vunpack.c.l.b16 %v377
    %v673 = vunpack.c.l.b16 %v378
    %v674 = vunpack.c.h.b16 %v378
    %v675 = vunpack.c.l.b16 %v379
    %v676 = vunpack.c.l.b16 %v380
    %v677 = vunpack.c.h.b16 %v380
    %v678 = vunpack.c.l.b16 %v381
    %v679 = vunpack.c.l.b16 %v382
    %v680 = vunpack.c.h.b16 %v382
    %v681 = vunpack.c.l.b16 %v383
    %v682 = vunpack.c.l.b16 %v384
    %v683 = vunpack.c.h.b16 %v384
    %v684 = vunpack.c.l.b16 %v385
    %v685 = vunpack.c.l.b16 %v386
    %v686 = vunpack.c.h.b16 %v386
    %v687 = vunpack.c.l.b16 %v387
    %v688 = vunpack.c.l.b16 %v388
    %v689 = vunpack.c.h.b16 %v388
    %v690 = vunpack.c.l.b16 %v389
    %v691 = vunpack.c.l.b16 %v390
    %v692 = vunpack.c.h.b16 %v390
    %v693 = vunpack.c.l.b16 %v391
    %v694 = vunpack.c.l.b16 %v392
    %v695 = vunpack.c.h.b16 %v392
    %v696 = vunpack.c.l.b16 %v393
    %v697 = vunpack.c.l.b16 %v394
    %v698 = vunpack.c.h.b16 %v394
    %v699 = vunpack.c.l.b16 %v395
    %v700 = vunpack.c.l.b16 %v396
    %v701 = vunpack.c.h.b16 %v396
    %v702 = vunpack.c.l.b16 %v397
    %v703 = vunpack.c.l.b16 %v398
    %v704 = vunpack.c.h.b16 %v398
    %v705 = vunpack.c.l.b16 %v399
    %v706 = vunpack.c.l.b16 %v400
    %v707 = vunpack.c.h.b16 %v400
    %v708 = vunpack.c.l.b16 %v401
    %v709 = vunpack.c.l.b16 %v402
    %v710 = vunpack.c.h.b16 %v402
    %v711 = vunpack.c.l.b16 %v403
    %v712 = vunpack.c.l.b16 %v404
    %v713 = vunpack.c.h.b16 %v404
    %v714 = vunpack.c.l.b16 %v405
    %v715 = vunpack.c.l.b16 %v406
    %v716 = vunpack.c.h.b16 %v406
    %v717 = vunpack.c.l.b16 %v407
    %v718 = vunpack.c.l.b16 %v408
    %v719 = vunpack.c.h.b16 %v408
    %v720 = vunpack.c.l.b16 %v409
    %v721 = vunpack.c.l.b16 %v410
    %v722 = vunpack.c.h.b16 %v410
    %v723 = vunpack.c.l.b16 %v411
    %v724 = vunpack.c.l.b16 %v412
    %v725 = vunpack.c.h.b16 %v412
    %v726 = vunpack.c.l.b16 %v413
    %v727 = vunpack.c.l.b16 %v414
    %v728 = vunpack.c.h.b16 %v414
    %v729 = vunpack.c.l.b16 %v415
    %v730 = vunpack.c.l.b16 %v416
    %v731 = vunpack.c.h.b16 %v416
    %v732 = vunpack.c.l.b16 %v417
    %v733 = vunpack.c.l.b16 %v418
    %v734 = vunpack.c.h.b16 %v418
    %v735 = vunpack.c.l.b16 %v419
    %v736 = vunpack.c.l.b16 %v420
    %v737 = vunpack.c.h.b16 %v420
    %v738 = vunpack.c.l.b16 %v421
    %v739 = vunpack.c.l.b16 %v422
    %v740 = vunpack.c.h.b16 %v422
    %v741 = vunpack.c.l.b16 %v423
    %v742 = vunpack.c.l.b16 %v424
    %v743 = vunpack.c.h.b16 %v424
    %v744 = vunpack.c.l.b16 %v425
    %v745 = vunpack.c.l.b16 %v426
    %v746 = vunpack.c.h.b16 %v426
    %v747 = vunpack.c.l.b16 %v427
    %v748 = vunpack.c.l.b16 %v428
    %v749 = vunpack.c.h.b16 %v428
    %v750 = vunpack.c.l.b16 %v429
    %v751 = vunpack.c.l.b16 %v430
    %v752 = vunpack.c.h.b16 %v430
    %v753 = vunpack.c.l.b16 %v431
    %v754 = vunpack.c.l.b16 %v432
    %v755 = vunpack.c.h.b16 %v432
    %v756 = vunpack.c.l.b16 %v433
    %v757 = vunpack.c.l.b16 %v434
    %v758 = vunpack.c.h.b16 %v434
    %v759 = vunpack.c.l.b16 %v435
    %v760 = vunpack.c.l.b16 %v436
    %v761 = vunpack.c.h.b16 %v436
    %v762 = vunpack.c.l.b16 %v437
    %v763 = vunpack.c.l.b16 %v438
    %v764 = vunpack.c.h.b16 %v438
    %v765 = vunpack.c.l.b16 %v439
    %v766 = vunpack.c.l.b16 %v440
    %v767 = vunpack.c.h.b16 %v440
    %v768 = vunpack.c.l.b16 %v441
    %v769 = vunpack.c.l.b16 %v442
    %v770 = vunpack.c.h.b16 %v442
    %v771 = vunpack.c.l.b16 %v443
    %v772 = vunpack.c.l.b16 %v444
    %v773 = vunpack.c.h.b16 %v444
    %v774 = vunpack.c.l.b16 %v445
    %v775 = vunpack.c.l.b16 %v446
    %v776 = vunpack.c.h.b16 %v446
    %v777 = vunpack.c.l.b16 %v447
    %v778 = vunpack.c.l.b16 %v448
    %v779 = vunpack.c.h.b16 %v448
    %v780 = vunpack.c.l.b16 %v449
    %v781 = vunpack.c.l.b16 %v450
    %v782 = vunpack.c.h.b16 %v450
    %v783 = vunpack.c.l.b16 %v451
    %v784 = vunpack.c.l.b16 %v452
    %v785 = vunpack.c.h.b16 %v452
    %v786 = vunpack.c.l.b16 %v453
    %v787 = vunpack.c.l.b16 %v454
    %v788 = vunpack.c.h.b16 %v454
    %v789 = vunpack.c.l.b16 %v455
    %v790 = vunpack.c.l.b16 %v456
    %v791 = vunpack.c.h.b16 %v456
    %v792 = vunpack.c.l.b16 %v457
    %v793 = vunpack.c.l.b16 %v458
    %v794 = vunpack.c.h.b16 %v458
    %v795 = vunpack.c.l.b16 %v459
    %v796 = vunpack.c.l.b16 %v460
    %v797 = vunpack.c.h.b16 %v460
    %v798 = vunpack.c.l.b16 %v461
    %v799 = vpack.c.b16 %v610, %v607
    %v800 = vpack.c.b16 %v611, %v608
    %v801 = vpack.c.b16 %v612, %v609
    %v802 = vpack.c.b16 %v616, %v613
    %v803 = vpack.c.b16 %v617, %v614
    %v804 = vpack.c.b16 %v618, %v615
    %v805 = vpack.c.b16 %v622, %v619
    %v806 = vpack.c.b16 %v623, %v620
    %v807 = vpack.c.b16 %v624, %v621
    %v808 = vpack.c.b16 %v628, %v625
    %v809 = vpack.c.b16 %v629, %v626
    %v810 = vpack.c.b16 %v630, %v627
    %v811 = vpack.c.b16 %v634, %v631
    %v812 = vpack.c.b16 %v635, %v632
    %v813 = vpack.c.b16 %v636, %v633
    %v814 = vpack.c.b16 %v640, %v637
    %v815 = vpack.c.b16 %v641, %v638
    %v816 = vpack.c.b16 %v642, %v639
    %v817 = vpack.c.b16 %v646, %v643
    %v818 = vpack.c.b16 %v647, %v644
    %v819 = vpack.c.b16 %v648, %v645
    %v820 = vpack.c.b16 %v652, %v649
    %v821 = vpack.c.b16 %v653, %v650
    %v822 = vpack.c.b16 %v654, %v651
    %v823 = vpack.c.b16 %v658, %v655
    %v824 = vpack.c.b16 %v659, %v656
    %v825 = vpack.c.b16 %v660, %v657
    %v826 = vpack.c.b16 %v664, %v661
    %v827 = vpack.c.b16 %v665, %v662
    %v828 = vpack.c.b16 %v666, %v663
    %v829 = vpack.c.b16 %v670, %v667
    %v830 = vpack.c.b16 %v671, %v668
    %v831 = vpack.c.b16 %v672, %v669
    %v832 = vpack.c.b16 %v676, %v673
    %v833 = vpack.c.b16 %v677, %v674
    %v834 = vpack.c.b16 %v678, %v675
    %v835 = vpack.c.b16 %v682, %v679
    %v836 = vpack.c.b16 %v683, %v680
    %v837 = vpack.c.b16 %v684, %v681
    %v838 = vpack.c.b16 %v688, %v685
    %v839 = vpack.c.b16 %v689, %v686
    %v840 = vpack.c.b16 %v690, %v687
    %v841 = vpack.c.b16 %v694, %v691
    %v842 = vpack.c.b16 %v695, %v692
    %v843 = vpack.c.b16 %v696, %v693
    %v844 = vpack.c.b16 %v700, %v697
    %v845 = vpack.c.b16 %v701, %v698
    %v846 = vpack.c.b16 %v702, %v699
    %v847 = vpack.c.b16 %v706, %v703
    %v848 = vpack.c.b16 %v707, %v704
    %v849 = vpack.c.b16 %v708, %v705
    %v850 = vpack.c.b16 %v712, %v709
    %v851 = vpack.c.b16 %v713, %v710
    %v852 = vpack.c.b16 %v714, %v711
    %v853 = vpack.c.b16 %v718, %v715
    %v854 = vpack.c.b16 %v719, %v716
    %v855 = vpack.c.b16 %v720, %v717
    %v856 = vpack.c.b16 %v724, %v721
    %v857 = vpack.c.b16 %v725, %v722
    %v858 = vpack.c.b16 %v726, %v723
    %v859 = vpack.c.b16 %v730, %v727
    %v860 = vpack.c.b16 %v731, %v728
    %v861 = vpack.c.b16 %v732, %v729
    %v862 = vpack.c.b16 %v736, %v733
    %v863 = vpack.c.b16 %v737, %v734
    %v864 = vpack.c.b16 %v738, %v735
    %v865 = vpack.c.b16 %v742, %v739
    %v866 = vpack.c.b16 %v743, %v740
    %v867 = vpack.c.b16 %v744, %v741
    %v868 = vpack.c.b16 %v748, %v745
    %v869 = vpack.c.b16 %v749, %v746
    %v870 = vpack.c.b16 %v750, %v747
    %v871 = vpack.c.b16 %v754, %v751
    %v872 = vpack.c.b16 %v755, %v752
    %v873 = vpack.c.b16 %v756, %v753
    %v874 = vpack.c.b16 %v760, %v757
    %v875 = vpack.c.b16 %v761, %v758
    %v876 = vpack.c.b16 %v762, %v759
    %v877 = vpack.c.b16 %v766, %v763
    %v878 = vpack.c.b16 %v767, %v764
    %v879 = vpack.c.b16 %v768, %v765
    %v880 = vpack.c.b16 %v772, %v769
    %v881 = vpack.c.b16 %v773, %v770
    %v882 = vpack.c.b16 %v774, %v771
    %v883 = vpack.c.b16 %v778, %v775
    %v884 = vpack.c.b16 %v779, %v776
    %v885 = vpack.c.b16 %v780, %v777
    %v886 = vpack.c.b16 %v784, %v781
    %v887 = vpack.c.b16 %v785, %v782
    %v888 = vpack.c.b16 %v786, %v783
    %v889 = vpack.c.b16 %v790, %v787
    %v890 = vpack.c.b16 %v791, %v788
    %v891 = vpack.c.b16 %v792, %v789
    %v892 = vpack.c.b16 %v796, %v793
    %v893 = vpack.c.b16 %v797, %v794
    %v894 = vpack.c.b16 %v798, %v795
    %991 = vmatprep.subr.bf16.mxu0 %v800
    %992 = vmatpush1.bf16.msra.mxu0 %v799
    %993 = vmatprep.subr.bf16.mxu0 %v803
    %994 = vmatpush1.bf16.msra.mxu0 %v802
    %995 = vmatprep.subr.bf16.mxu0 %v806
    %996 = vmatpush1.bf16.msra.mxu0 %v805
    %997 = vmatprep.subr.bf16.mxu0 %v809
    %998 = vmatpush1.bf16.msra.mxu0 %v808
    %999 = vmatprep.subr.bf16.mxu0 %v812
    %1000 = vmatpush1.bf16.msra.mxu0 %v811
    %1001 = vmatprep.subr.bf16.mxu0 %v815
    %1002 = vmatpush1.bf16.msra.mxu0 %v814
    %1003 = vmatprep.subr.bf16.mxu0 %v818
    %1004 = vmatpush1.bf16.msra.mxu0 %v817
    %1005 = vmatprep.subr.bf16.mxu0 %v821
    %1006 = vmatpush1.bf16.msra.mxu0 %v820
    %1007 = vmatprep.subr.bf16.mxu0 %v824
    %1008 = vmatpush1.bf16.msra.mxu0 %v823
    %1009 = vmatprep.subr.bf16.mxu0 %v827
    %1010 = vmatpush1.bf16.msra.mxu0 %v826
    %1011 = vmatprep.subr.bf16.mxu0 %v830
    %1012 = vmatpush1.bf16.msra.mxu0 %v829
    %1013 = vmatprep.subr.bf16.mxu0 %v833
    %1014 = vmatpush1.bf16.msra.mxu0 %v832
    %1015 = vmatprep.subr.bf16.mxu0 %v836
    %1016 = vmatpush1.bf16.msra.mxu0 %v835
    %1017 = vmatprep.subr.bf16.mxu0 %v839
    %1018 = vmatpush1.bf16.msra.mxu0 %v838
    %1019 = vmatprep.subr.bf16.mxu0 %v842
    %1020 = vmatpush1.bf16.msra.mxu0 %v841
    %1021 = vmatprep.subr.bf16.mxu0 %v845
    %1022 = vmatpush1.bf16.msra.mxu0 %v844
    %1023 = vmatprep.mubr.bf16.mxu0 %v331
    %1024 = vmatmul.mubr.bf16.gmra.mrb[0].mxu0 %v330
    %v1025 = vpop.f32.mrb[0].mxu0
    %v1026 = vadd.f32 %v467, %v1025
    %v1027 = vpop.f32.mrb[0].mxu0
    %v1028 = vadd.f32 %v471, %v1027
    %v1029 = vpop.f32.mrb[0].mxu0
    %v1030 = vpop.f32.mrb[0].mxu0
    %1031 = vdwg.mxu0
    %1032 = vmatprep.subr.bf16.mxu0 %v848
    %1033 = vmatpush1.bf16.msra.mxu0 %v847
    %1034 = vmatprep.subr.bf16.mxu0 %v851
    %1035 = vmatpush1.bf16.msra.mxu0 %v850
    %1036 = vmatprep.subr.bf16.mxu0 %v854
    %1037 = vmatpush1.bf16.msra.mxu0 %v853
    %1038 = vmatprep.subr.bf16.mxu0 %v857
    %1039 = vmatpush1.bf16.msra.mxu0 %v856
    %1040 = vmatprep.subr.bf16.mxu0 %v860
    %1041 = vmatpush1.bf16.msra.mxu0 %v859
    %1042 = vmatprep.subr.bf16.mxu0 %v863
    %1043 = vmatpush1.bf16.msra.mxu0 %v862
    %1044 = vmatprep.subr.bf16.mxu0 %v866
    %1045 = vmatpush1.bf16.msra.mxu0 %v865
    %1046 = vmatprep.subr.bf16.mxu0 %v869
    %1047 = vmatpush1.bf16.msra.mxu0 %v868
    %1048 = vmatprep.subr.bf16.mxu0 %v872
    %1049 = vmatpush1.bf16.msra.mxu0 %v871
    %1050 = vmatprep.subr.bf16.mxu0 %v875
    %1051 = vmatpush1.bf16.msra.mxu0 %v874
    %1052 = vmatprep.subr.bf16.mxu0 %v878
    %1053 = vmatpush1.bf16.msra.mxu0 %v877
    %1054 = vmatprep.subr.bf16.mxu0 %v881
    %1055 = vmatpush1.bf16.msra.mxu0 %v880
    %1056 = vmatprep.subr.bf16.mxu0 %v884
    %1057 = vmatpush1.bf16.msra.mxu0 %v883
    %1058 = vmatprep.subr.bf16.mxu0 %v887
    %1059 = vmatpush1.bf16.msra.mxu0 %v886
    %1060 = vmatprep.subr.bf16.mxu0 %v890
    %1061 = vmatpush1.bf16.msra.mxu0 %v889
    %1062 = vmatprep.subr.bf16.mxu0 %v893
    %1063 = vmatpush1.bf16.msra.mxu0 %v892
    %1064 = vmatprep.mubr.bf16.mxu0 %v333
    %1065 = vmatmul.mubr.bf16.gmra.mrb[0].mxu0 %v332
    %v1066 = vpop.f32.mrb[0].mxu0
    %v1067 = vadd.f32 %v1026, %v1066
    %v1068 = vpop.f32.mrb[0].mxu0
    %v1069 = vadd.f32 %v1028, %v1068
    %v1070 = vpop.f32.mrb[0].mxu0
    %v1071 = vpop.f32.mrb[0].mxu0
    %1072 = vdwg.mxu0
    %1073 = vmatprep.subr.bf16.mxu0 0
    %1074 = vmatpush1.bf16.msra.mxu0 %v801
    %1075 = vmatprep.subr.bf16.mxu0 0
    %1076 = vmatpush1.bf16.msra.mxu0 %v804
    %1077 = vmatprep.subr.bf16.mxu0 0
    %1078 = vmatpush1.bf16.msra.mxu0 %v807
    %1079 = vmatprep.subr.bf16.mxu0 0
    %1080 = vmatpush1.bf16.msra.mxu0 %v810
    %1081 = vmatprep.subr.bf16.mxu0 0
    %1082 = vmatpush1.bf16.msra.mxu0 %v813
    %1083 = vmatprep.subr.bf16.mxu0 0
    %1084 = vmatpush1.bf16.msra.mxu0 %v816
    %1085 = vmatprep.subr.bf16.mxu0 0
    %1086 = vmatpush1.bf16.msra.mxu0 %v819
    %1087 = vmatprep.subr.bf16.mxu0 0
    %1088 = vmatpush1.bf16.msra.mxu0 %v822
    %1089 = vmatprep.subr.bf16.mxu0 0
    %1090 = vmatpush1.bf16.msra.mxu0 %v825
    %1091 = vmatprep.subr.bf16.mxu0 0
    %1092 = vmatpush1.bf16.msra.mxu0 %v828
    %1093 = vmatprep.subr.bf16.mxu0 0
    %1094 = vmatpush1.bf16.msra.mxu0 %v831
    %1095 = vmatprep.subr.bf16.mxu0 0
    %1096 = vmatpush1.bf16.msra.mxu0 %v834
    %1097 = vmatprep.subr.bf16.mxu0 0
    %1098 = vmatpush1.bf16.msra.mxu0 %v837
    %1099 = vmatprep.subr.bf16.mxu0 0
    %1100 = vmatpush1.bf16.msra.mxu0 %v840
    %1101 = vmatprep.subr.bf16.mxu0 0
    %1102 = vmatpush1.bf16.msra.mxu0 %v843
    %1103 = vmatprep.subr.bf16.mxu0 0
    %1104 = vmatpush1.bf16.msra.mxu0 %v846
    %1105 = vmatprep.mubr.bf16.mxu0 %v331
    %1106 = vmatmul.mubr.bf16.gmra.mrb[0].mxu0 %v330
    %v1107 = vpop.f32.mrb[0].mxu0
    %v1108 = vadd.f32 %v475, %v1107
    %v1109 = vpop.f32.mrb[0].mxu0
    %v1110 = vpop.f32.mrb[0].mxu0
    %v1111 = vpop.f32.mrb[0].mxu0
    %1112 = vdwg.mxu0
    %1113 = vmatprep.subr.bf16.mxu0 0
    %1114 = vmatpush1.bf16.msra.mxu0 %v849
    %1115 = vmatprep.subr.bf16.mxu0 0
    %1116 = vmatpush1.bf16.msra.mxu0 %v852
    %1117 = vmatprep.subr.bf16.mxu0 0
    %1118 = vmatpush1.bf16.msra.mxu0 %v855
    %1119 = vmatprep.subr.bf16.mxu0 0
    %1120 = vmatpush1.bf16.msra.mxu0 %v858
    %1121 = vmatprep.subr.bf16.mxu0 0
    %1122 = vmatpush1.bf16.msra.mxu0 %v861
    %1123 = vmatprep.subr.bf16.mxu0 0
    %1124 = vmatpush1.bf16.msra.mxu0 %v864
    %1125 = vmatprep.subr.bf16.mxu0 0
    %1126 = vmatpush1.bf16.msra.mxu0 %v867
    %1127 = vmatprep.subr.bf16.mxu0 0
    %1128 = vmatpush1.bf16.msra.mxu0 %v870
    %1129 = vmatprep.subr.bf16.mxu0 0
    %1130 = vmatpush1.bf16.msra.mxu0 %v873
    %1131 = vmatprep.subr.bf16.mxu0 0
    %1132 = vmatpush1.bf16.msra.mxu0 %v876
    %1133 = vmatprep.subr.bf16.mxu0 0
    %1134 = vmatpush1.bf16.msra.mxu0 %v879
    %1135 = vmatprep.subr.bf16.mxu0 0
    %1136 = vmatpush1.bf16.msra.mxu0 %v882
    %1137 = vmatprep.subr.bf16.mxu0 0
    %1138 = vmatpush1.bf16.msra.mxu0 %v885
    %1139 = vmatprep.subr.bf16.mxu0 0
    %1140 = vmatpush1.bf16.msra.mxu0 %v888
    %1141 = vmatprep.subr.bf16.mxu0 0
    %1142 = vmatpush1.bf16.msra.mxu0 %v891
    %1143 = vmatprep.subr.bf16.mxu0 0
    %1144 = vmatpush1.bf16.msra.mxu0 %v894
    %1145 = vmatprep.mubr.bf16.mxu0 %v333
    %1146 = vmatmul.mubr.bf16.gmra.mrb[0].mxu0 %v332
    %v1147 = vpop.f32.mrb[0].mxu0
    %v1148 = vadd.f32 %v1108, %v1147
    %v1149 = vpop.f32.mrb[0].mxu0
    %v1150 = vpop.f32.mrb[0].mxu0
    %v1151 = vpop.f32.mrb[0].mxu0
    %1152 = vdwg.mxu0
    %v1153 = vmax.f32 %v1067, 0.0
    %v1154 = vmax.f32 %v1069, 0.0
    %v1155 = vmax.f32 %v1148, 0.0
    %v1156 = vpack.c.bf16 %v1153, %v1153
    %v1157 = vpack.c.bf16 %v1154, %v1154
    %v1158 = vpack.c.bf16 %v1155, %v1155
    %v1159 = vld [vmem:[%s7] sm:$0xf]
    %v1160 = vld [vmem:[%s7 + $0x4] sm:$0xf]
    %v1161 = vld [vmem:[%s7 + $0x8] sm:$0xf]
    %v1162 = vld [vmem:[%s7 + $0xc] sm:$0xf]
    %v1163 = vld [vmem:[%s7 + $0x10] sm:$0xf]
    %v1164 = vld [vmem:[%s7 + $0x14] sm:$0xf]
    %v1165 = vld [vmem:[%s7 + $0x18] sm:$0xf]
    %v1166 = vld [vmem:[%s7 + $0x1c] sm:$0xf]
    %v1167 = vld [vmem:[%s7 + $0x20] sm:$0xf]
    %v1168 = vld [vmem:[%s7 + $0x24] sm:$0xf]
    %v1169 = vld [vmem:[%s7 + $0x28] sm:$0xf]
    %v1170 = vld [vmem:[%s7 + $0x2c] sm:$0xf]
    %v1171 = vld [vmem:[%s7 + $0x30] sm:$0xf]
    %v1172 = vld [vmem:[%s7 + $0x34] sm:$0xf]
    %v1173 = vld [vmem:[%s7 + $0x38] sm:$0xf]
    %v1174 = vld [vmem:[%s7 + $0x3c] sm:$0xf]
    %v1175 = vld [vmem:[%s7 + $0x40] sm:$0xf]
    %v1176 = vld [vmem:[%s7 + $0x44] sm:$0xf]
    %v1177 = vld [vmem:[%s7 + $0x48] sm:$0xf]
    %v1178 = vld [vmem:[%s7 + $0x4c] sm:$0xf]
    %v1179 = vld [vmem:[%s7 + $0x50] sm:$0xf]
    %v1180 = vld [vmem:[%s7 + $0x54] sm:$0xf]
    %v1181 = vld [vmem:[%s7 + $0x58] sm:$0xf]
    %v1182 = vld [vmem:[%s7 + $0x5c] sm:$0xf]
    %v1183 = vld [vmem:[%s7 + $0x60] sm:$0xf]
    %v1184 = vld [vmem:[%s7 + $0x64] sm:$0xf]
    %v1185 = vld [vmem:[%s7 + $0x68] sm:$0xf]
    %v1186 = vld [vmem:[%s7 + $0x6c] sm:$0xf]
    %v1187 = vld [vmem:[%s7 + $0x70] sm:$0xf]
    %v1188 = vld [vmem:[%s7 + $0x74] sm:$0xf]
    %v1189 = vld [vmem:[%s7 + $0x78] sm:$0xf]
    %v1190 = vld [vmem:[%s7 + $0x7c] sm:$0xf]
    %v1191 = vld [vmem:[%s7 + $0x80] sm:$0xf]
    %v1192 = vld [vmem:[%s7 + $0x84] sm:$0xf]
    %v1193 = vld [vmem:[%s7 + $0x88] sm:$0xf]
    %v1194 = vld [vmem:[%s7 + $0x8c] sm:$0xf]
    %v1195 = vld [vmem:[%s7 + $0x90] sm:$0xf]
    %v1196 = vld [vmem:[%s7 + $0x94] sm:$0xf]
    %v1197 = vld [vmem:[%s7 + $0x98] sm:$0xf]
    %v1198 = vld [vmem:[%s7 + $0x9c] sm:$0xf]
    %v1199 = vld [vmem:[%s7 + $0xa0] sm:$0xf]
    %v1200 = vld [vmem:[%s7 + $0xa4] sm:$0xf]
    %v1201 = vld [vmem:[%s7 + $0xa8] sm:$0xf]
    %v1202 = vld [vmem:[%s7 + $0xac] sm:$0xf]
    %v1203 = vld [vmem:[%s7 + $0xb0] sm:$0xf]
    %v1204 = vld [vmem:[%s7 + $0xb4] sm:$0xf]
    %v1205 = vld [vmem:[%s7 + $0xb8] sm:$0xf]
    %v1206 = vld [vmem:[%s7 + $0xbc] sm:$0xf]
    %v1207 = vld [vmem:[%s8] sm:$0x1]
    %v1209 = vlaneseq
    %v1210 = vshrl.u32 %v1209, 7
    %v1211 = vsub.s32 0, %v1210
    %v1212 = vrot.slane %v1207, %v1211
    %v1262 = vunpack.c.l.b16 %v1159
    %v1263 = vunpack.c.l.b16 %v1160
    %v1264 = vunpack.c.l.b16 %v1161
    %v1265 = vunpack.c.l.b16 %v1162
    %v1266 = vunpack.c.l.b16 %v1163
    %v1267 = vunpack.c.l.b16 %v1164
    %v1268 = vunpack.c.l.b16 %v1165
    %v1269 = vunpack.c.l.b16 %v1166
    %v1270 = vunpack.c.l.b16 %v1167
    %v1271 = vunpack.c.l.b16 %v1168
    %v1272 = vunpack.c.l.b16 %v1169
    %v1273 = vunpack.c.l.b16 %v1170
    %v1274 = vunpack.c.l.b16 %v1171
    %v1275 = vunpack.c.l.b16 %v1172
    %v1276 = vunpack.c.l.b16 %v1173
    %v1277 = vunpack.c.l.b16 %v1174
    %v1278 = vunpack.c.l.b16 %v1175
    %v1279 = vunpack.c.l.b16 %v1176
    %v1280 = vunpack.c.l.b16 %v1177
    %v1281 = vunpack.c.l.b16 %v1178
    %v1282 = vunpack.c.l.b16 %v1179
    %v1283 = vunpack.c.l.b16 %v1180
    %v1284 = vunpack.c.l.b16 %v1181
    %v1285 = vunpack.c.l.b16 %v1182
    %v1286 = vunpack.c.l.b16 %v1183
    %v1287 = vunpack.c.l.b16 %v1184
    %v1288 = vunpack.c.l.b16 %v1185
    %v1289 = vunpack.c.l.b16 %v1186
    %v1290 = vunpack.c.l.b16 %v1187
    %v1291 = vunpack.c.l.b16 %v1188
    %v1292 = vunpack.c.l.b16 %v1189
    %v1293 = vunpack.c.l.b16 %v1190
    %v1294 = vunpack.c.l.b16 %v1191
    %v1295 = vunpack.c.l.b16 %v1192
    %v1296 = vunpack.c.l.b16 %v1193
    %v1297 = vunpack.c.l.b16 %v1194
    %v1298 = vunpack.c.l.b16 %v1195
    %v1299 = vunpack.c.l.b16 %v1196
    %v1300 = vunpack.c.l.b16 %v1197
    %v1301 = vunpack.c.l.b16 %v1198
    %v1302 = vunpack.c.l.b16 %v1199
    %v1303 = vunpack.c.l.b16 %v1200
    %v1304 = vunpack.c.l.b16 %v1201
    %v1305 = vunpack.c.l.b16 %v1202
    %v1306 = vunpack.c.l.b16 %v1203
    %v1307 = vunpack.c.l.b16 %v1204
    %v1308 = vunpack.c.l.b16 %v1205
    %v1309 = vunpack.c.l.b16 %v1206
    %v1310 = vpack.c.b16 %v1263, %v1262
    %v1311 = vpack.c.b16 %v1265, %v1264
    %v1312 = vpack.c.b16 %v1267, %v1266
    %v1313 = vpack.c.b16 %v1269, %v1268
    %v1314 = vpack.c.b16 %v1271, %v1270
    %v1315 = vpack.c.b16 %v1273, %v1272
    %v1316 = vpack.c.b16 %v1275, %v1274
    %v1317 = vpack.c.b16 %v1277, %v1276
    %v1318 = vpack.c.b16 %v1279, %v1278
    %v1319 = vpack.c.b16 %v1281, %v1280
    %v1320 = vpack.c.b16 %v1283, %v1282
    %v1321 = vpack.c.b16 %v1285, %v1284
    %v1322 = vpack.c.b16 %v1287, %v1286
    %v1323 = vpack.c.b16 %v1289, %v1288
    %v1324 = vpack.c.b16 %v1291, %v1290
    %v1325 = vpack.c.b16 %v1293, %v1292
    %v1326 = vpack.c.b16 %v1295, %v1294
    %v1327 = vpack.c.b16 %v1297, %v1296
    %v1328 = vpack.c.b16 %v1299, %v1298
    %v1329 = vpack.c.b16 %v1301, %v1300
    %v1330 = vpack.c.b16 %v1303, %v1302
    %v1331 = vpack.c.b16 %v1305, %v1304
    %v1332 = vpack.c.b16 %v1307, %v1306
    %v1333 = vpack.c.b16 %v1309, %v1308
    %1358 = vmatprep.subr.bf16.mxu0 0
    %1359 = vmatpush1.bf16.msra.mxu0 %v1310
    %1360 = vmatprep.subr.bf16.mxu0 0
    %1361 = vmatpush1.bf16.msra.mxu0 %v1311
    %1362 = vmatprep.subr.bf16.mxu0 0
    %1363 = vmatpush1.bf16.msra.mxu0 %v1312
    %1364 = vmatprep.subr.bf16.mxu0 0
    %1365 = vmatpush1.bf16.msra.mxu0 %v1313
    %1366 = vmatprep.subr.bf16.mxu0 0
    %1367 = vmatpush1.bf16.msra.mxu0 %v1314
    %1368 = vmatprep.subr.bf16.mxu0 0
    %1369 = vmatpush1.bf16.msra.mxu0 %v1315
    %1370 = vmatprep.subr.bf16.mxu0 0
    %1371 = vmatpush1.bf16.msra.mxu0 %v1316
    %1372 = vmatprep.subr.bf16.mxu0 0
    %1373 = vmatpush1.bf16.msra.mxu0 %v1317
    %1374 = vmatprep.subr.bf16.mxu0 0
    %1375 = vmatpush1.bf16.msra.mxu0 %v1318
    %1376 = vmatprep.subr.bf16.mxu0 0
    %1377 = vmatpush1.bf16.msra.mxu0 %v1319
    %1378 = vmatprep.subr.bf16.mxu0 0
    %1379 = vmatpush1.bf16.msra.mxu0 %v1320
    %1380 = vmatprep.subr.bf16.mxu0 0
    %1381 = vmatpush1.bf16.msra.mxu0 %v1321
    %1382 = vmatprep.subr.bf16.mxu0 0
    %1383 = vmatpush1.bf16.msra.mxu0 %v1322
    %1384 = vmatprep.subr.bf16.mxu0 0
    %1385 = vmatpush1.bf16.msra.mxu0 %v1323
    %1386 = vmatprep.subr.bf16.mxu0 0
    %1387 = vmatpush1.bf16.msra.mxu0 %v1324
    %1388 = vmatprep.subr.bf16.mxu0 0
    %1389 = vmatpush1.bf16.msra.mxu0 %v1325
    %1390 = vmatprep.mubr.bf16.mxu0 %v1157
    %1391 = vmatmul.mubr.bf16.gmra.mrb[0].mxu0 %v1156
    %v1392 = vpop.f32.mrb[0].mxu0
    %v1393 = vadd.f32 %v1212, %v1392
    %v1394 = vpop.f32.mrb[0].mxu0
    %v1395 = vpop.f32.mrb[0].mxu0
    %v1396 = vpop.f32.mrb[0].mxu0
    %1397 = vdwg.mxu0
    %1398 = vmatprep.subr.bf16.mxu0 0
    %1399 = vmatpush1.bf16.msra.mxu0 %v1326
    %1400 = vmatprep.subr.bf16.mxu0 0
    %1401 = vmatpush1.bf16.msra.mxu0 %v1327
    %1402 = vmatprep.subr.bf16.mxu0 0
    %1403 = vmatpush1.bf16.msra.mxu0 %v1328
    %1404 = vmatprep.subr.bf16.mxu0 0
    %1405 = vmatpush1.bf16.msra.mxu0 %v1329
    %1406 = vmatprep.subr.bf16.mxu0 0
    %1407 = vmatpush1.bf16.msra.mxu0 %v1330
    %1408 = vmatprep.subr.bf16.mxu0 0
    %1409 = vmatpush1.bf16.msra.mxu0 %v1331
    %1410 = vmatprep.subr.bf16.mxu0 0
    %1411 = vmatpush1.bf16.msra.mxu0 %v1332
    %1412 = vmatprep.subr.bf16.mxu0 0
    %1413 = vmatpush1.bf16.msra.mxu0 %v1333
    %1414 = vmatprep.subr.bf16.mxu0 0
    %1415 = vmatpush1.bf16.msra.mxu0 0
    %1416 = vmatprep.subr.bf16.mxu0 0
    %1417 = vmatpush1.bf16.msra.mxu0 0
    %1418 = vmatprep.subr.bf16.mxu0 0
    %1419 = vmatpush1.bf16.msra.mxu0 0
    %1420 = vmatprep.subr.bf16.mxu0 0
    %1421 = vmatpush1.bf16.msra.mxu0 0
    %1422 = vmatprep.subr.bf16.mxu0 0
    %1423 = vmatpush1.bf16.msra.mxu0 0
    %1424 = vmatprep.subr.bf16.mxu0 0
    %1425 = vmatpush1.bf16.msra.mxu0 0
    %1426 = vmatprep.subr.bf16.mxu0 0
    %1427 = vmatpush1.bf16.msra.mxu0 0
    %1428 = vmatprep.subr.bf16.mxu0 0
    %1429 = vmatpush1.bf16.msra.mxu0 0
    %1430 = vmatprep.mubr.bf16.mxu0 0
    %1431 = vmatmul.mubr.bf16.gmra.mrb[0].mxu0 %v1158
    %v1432 = vpop.f32.mrb[0].mxu0
    %v1433 = vadd.f32 %v1393, %v1432
    %v1434 = vpop.f32.mrb[0].mxu0
    %v1435 = vpop.f32.mrb[0].mxu0
    %v1436 = vpop.f32.mrb[0].mxu0
    %1437 = vdwg.mxu0
    %v1438 = vtanh.pop %v1433
    %v1439 = vmul.f32 %v1438, 0.05
    %v1440 = vadd.f32 %v1439, %v48
    %v1441 = vmax.f32 %v1440, -1.0
    %v1442 = vmin.f32 %v1441, 1.0
    %1443 = vst.msk [vmem:[#allocation5] sm:$0xff] %vm70, %v1442
    // Predicated region
    $region42: #{tpu_custom_call.1} parent=1 // pred_check
      _
    $region43: #{tpu_custom_call.1} parent=1 // pred_check_branch
      %1445 = sbr.rel (0) target = $region45
    $region44: #{tpu_custom_call.1} parent=1 // pred_region
      %s1447 = ssub.s32 128, 128
      %1448 = vsyncadd [#allocation4], %s1447
      %s1450 = sshll.u32 [#allocation5], 4
      %s1451 = int_to_ptr.vmem [resolvable:$true] %s1450
      %1453 = dma.vmem_to_hbm [thread:$0]  %s1451, 128, %s9, [#allocation4]
    $region45: #{tpu_custom_call.1} parent=1 // pred_fallthru
      _
    // Predicated region
    $region46: #{tpu_custom_call.1} parent=1 // pred_check
      _
    $region47: #{tpu_custom_call.1} parent=1 // pred_check_branch
      %1455 = sbr.rel (0) target = $region49
    $region48: #{tpu_custom_call.1} parent=1 // pred_region
      %1456 = dma.done [#allocation4], 128
    $region49: #{tpu_custom_call.1} parent=1 // pred_fallthru
      _
    %1457 = vsyncpa [#allocation3], 1
    %1458 = vsyncpa [#allocation4], 1

</llo_original>
